<compile_context>
chip_gen: v7x
topology: tpu7x:2x2x1
jax: 0.10.0
libtpu: 0.0.40
codegen_flags: <defaults>
</compile_context>

<pallas_src>
import jax
import jax.numpy as jnp
from jax import lax
from jax.experimental import pallas as pl
from jax.experimental.pallas import tpu as pltpu

# ----------------------------- model config ---------------------------------
BLOCK_SIZE = 10
EMB_DIM = 15
VOCAB_SIZE = 27
HIDDEN_SIZE = 32
BATCH = 8

VP = 32                       # per-position one-hot width (vocab 27 -> 32, pow2)
NPAD = 128                    # lane-dense width for the final logits only
K1 = BLOCK_SIZE * VP          # 320: K dim of the fused (embedding + lin1) matmul


# ------------------------------ Pallas kernel -------------------------------
def nextchar_kernel(tok_ref, w1_ref, w23_ref, w4_ref, b123_ref, b4_ref, o_ref):
    """Fused embedding gather + 4-layer sin-MLP; all operands resident in VMEM.

    tok_ref : (B, BLOCK_SIZE) int32
    w1_ref  : (K1, 32)     f32   -- kron(I_P, emb) @ lin1.W (exact fold)
    w23_ref : (2, 32, 32)  bf16  -- lin2 / lin3 weights
    w4_ref  : (32, NPAD)   bf16  -- lin4 weight, zero-padded to 128 lanes
    b123_ref: (3, 1, 32)   f32   -- b1..b3
    b4_ref  : (1, NPAD)    f32   -- b4, zero-padded
    o_ref   : (B, NPAD)    f32   -- logits live in [:, :VOCAB_SIZE]
    """
    tok = tok_ref[...]                                           # (B, P) int32
    B = tok.shape[0]

    # One-hot over the fused (position, vocab-slot) axis:
    #   oh[b, p*VP + tok[b, p]] = 1
    targets = tok + VP * lax.broadcasted_iota(jnp.int32, (B, BLOCK_SIZE), 1)
    lane = lax.broadcasted_iota(jnp.int32, (B, K1), 1)           # (B, 320)
    hit = lane == targets[:, 0:1]
    for p in range(1, BLOCK_SIZE):                               # static unroll (9)
        hit = hit | (lane == targets[:, p:p + 1])
    oh = hit.astype(jnp.float32)                                 # single cast

    # Layer 1: embedding gather + lin1 fused into one (B,320)x(320,32) matmul.
    h = jnp.sin(jnp.dot(oh, w1_ref[...], preferred_element_type=jnp.float32)
                + b123_ref[0])
    # Layers 2-3: bf16-stored weights, upcast once, f32 accumulate.
    h = jnp.sin(jnp.dot(h, w23_ref[0].astype(jnp.float32),
                        preferred_element_type=jnp.float32) + b123_ref[1])
    h = jnp.sin(jnp.dot(h, w23_ref[1].astype(jnp.float32),
                        preferred_element_type=jnp.float32) + b123_ref[2])
    # Layer 4: (B,32)x(32,128) -> lane-dense store; logits in [:, :VOCAB_SIZE].
    o_ref[...] = (jnp.dot(h, w4_ref[...].astype(jnp.float32),
                          preferred_element_type=jnp.float32) + b4_ref[...])


# -------------------------- one-time weight packing --------------------------
def pack_params(params):
    """Param-only preprocessing (do once per weight update, not per forward)."""
    emb = params["emb"].astype(jnp.float32)                      # (27, 15)
    emb_pad = jnp.zeros((VP, EMB_DIM), jnp.float32).at[:VOCAB_SIZE].set(emb)

    # W1_eff[p*VP + v, h] = sum_e emb[v, e] * W1[p*EMB_DIM + e, h]   (exact fold)
    w1r = params["w1"].reshape(BLOCK_SIZE, EMB_DIM, HIDDEN_SIZE)  # (10, 15, 32)
    w1_eff = jnp.einsum("ve,peh->pvh", emb_pad, w1r).reshape(K1, HIDDEN_SIZE)

    w23 = jnp.stack([params["w2"], params["w3"]]).astype(jnp.bfloat16)   # (2,32,32)
    w4 = jnp.zeros((HIDDEN_SIZE, NPAD), jnp.float32)
    w4 = w4.at[:, :VOCAB_SIZE].set(params["w4"]).astype(jnp.bfloat16)    # (32,128)
    b123 = jnp.stack([params["b1"], params["b2"], params["b3"]])         # (3,1,32) f32
    b4 = jnp.zeros((1, NPAD), jnp.float32).at[:, :VOCAB_SIZE].set(params["b4"])
    return dict(w1=w1_eff.astype(jnp.float32), w23=w23, w4=w4, b123=b123, b4=b4)


# ------------------------------- forward pass --------------------------------
def nextchar_forward(tokens, packed):
    """tokens: (B, block_size) int32 -> logits (B, vocab_size) float32."""
    B = tokens.shape[0]
    vmem = pl.BlockSpec(memory_space=pltpu.MemorySpace.VMEM)

    operands = (tokens, packed["w1"], packed["w23"], packed["w4"],
                packed["b123"], packed["b4"])
    flops = 2 * B * (K1 * HIDDEN_SIZE + 2 * HIDDEN_SIZE * HIDDEN_SIZE
                     + HIDDEN_SIZE * NPAD)
    bytes_accessed = (sum(x.size * x.dtype.itemsize for x in operands)
                      + B * NPAD * 4)
    cost = pl.CostEstimate(flops=flops, transcendentals=3 * B * HIDDEN_SIZE,
                           bytes_accessed=bytes_accessed)

    logits_pad = pl.pallas_call(
        nextchar_kernel,
        out_shape=jax.ShapeDtypeStruct((B, NPAD), jnp.float32),
        in_specs=[vmem] * len(operands),
        out_specs=vmem,
        cost_estimate=cost,
    )(*operands)
    return logits_pad[:, :VOCAB_SIZE]


# --------------------------- deterministic init ------------------------------
def init_params(key):
    ks = jax.random.split(key, 9)

    def linear(kw, kb, fan_in, fan_out):
        bound = 1.0 / jnp.sqrt(float(fan_in))
        w = jax.random.uniform(kw, (fan_in, fan_out), jnp.float32, -bound, bound)
        b = jax.random.uniform(kb, (1, fan_out), jnp.float32, -bound, bound)
        return w, b

    emb = jax.random.normal(ks[0], (VOCAB_SIZE, EMB_DIM), jnp.float32)
    w1, b1 = linear(ks[1], ks[2], BLOCK_SIZE * EMB_DIM, HIDDEN_SIZE)
    w2, b2 = linear(ks[3], ks[4], HIDDEN_SIZE, HIDDEN_SIZE)
    w3, b3 = linear(ks[5], ks[6], HIDDEN_SIZE, HIDDEN_SIZE)
    w4, b4 = linear(ks[7], ks[8], HIDDEN_SIZE, VOCAB_SIZE)
    return dict(emb=emb, w1=w1, b1=b1, w2=w2, b2=b2,
                w3=w3, b3=b3, w4=w4, b4=b4)


def nextchar_reference(tokens, params):
    """Pure-JAX reference mirroring the PyTorch forward (unpacked params)."""
    x = jnp.take(params["emb"], tokens, axis=0).reshape(tokens.shape[0], -1)
    x = jnp.sin(x @ params["w1"] + params["b1"])
    x = jnp.sin(x @ params["w2"] + params["b2"])
    x = jnp.sin(x @ params["w3"] + params["b3"])
    return x @ params["w4"] + params["b4"]


# ---------------------------------- main -------------------------------------
if __name__ == "__main__":
    key = jax.random.PRNGKey(0)
    k_tok, k_par = jax.random.split(key)
    params = init_params(k_par)
    tokens = jax.random.randint(k_tok, (BATCH, BLOCK_SIZE), 0, VOCAB_SIZE,
                                dtype=jnp.int32)

    packed = pack_params(params)                       # once per weight update
    logits = jax.jit(nextchar_forward)(tokens, packed)
    jax.block_until_ready(logits)

    assert logits.shape == (BATCH, VOCAB_SIZE)

    # Tight check: reference computed with the same bf16-rounded w2/w3/w4
    # (f32 math) -- verifies the kernel itself.
    params_q = dict(params)
    for name in ("w2", "w3", "w4"):
        params_q[name] = params[name].astype(jnp.bfloat16).astype(jnp.float32)
    ref_q = nextchar_reference(tokens, params_q)
    assert jnp.allclose(logits, ref_q, atol=1e-3, rtol=1e-3)

    # Loose check vs the original full-f32 module -- bounds the bf16 weight
    # quantization error (tolerance loosened per the perf-review caveat).
    ref = nextchar_reference(tokens, params)
    assert jnp.allclose(logits, ref, atol=5e-2, rtol=5e-2)

    print("KERNEL_OK")
</pallas_src>

<mosaic_0001>
module attributes {stable_mosaic.version = 11 : i64} {
  func.func @nextchar_kernel(%arg0: memref<8x10xi32, #tpu.memory_space<vmem>>, %arg1: memref<320x32xf32, #tpu.memory_space<vmem>>, %arg2: memref<2x32x32xbf16, #tpu.memory_space<vmem>>, %arg3: memref<32x128xbf16, #tpu.memory_space<vmem>>, %arg4: memref<3x1x32xf32, #tpu.memory_space<vmem>>, %arg5: memref<1x128xf32, #tpu.memory_space<vmem>>, %arg6: memref<8x128xf32, #tpu.memory_space<vmem>>) attributes {dimension_semantics = [], scalar_prefetch = 0 : i64, scratch_operands = 0 : i64, tpu.core_type = #tpu.core_type<tc>} {
    %c0 = arith.constant 0 : index
    %c0_0 = arith.constant 0 : index
    %0 = vector.load %arg0[%c0, %c0_0] : memref<8x10xi32, #tpu.memory_space<vmem>>, vector<8x10xi32>
    %1 = tpu.iota {dimensions = array<i32: 1>} : vector<8x10xi32>
    %c32_i32 = arith.constant 32 : i32
    %2 = vector.broadcast %c32_i32 : i32 to vector<8x10xi32>
    %3 = arith.muli %2, %1 : vector<8x10xi32>
    %4 = arith.addi %0, %3 : vector<8x10xi32>
    %5 = tpu.iota {dimensions = array<i32: 1>} : vector<8x320xi32>
    %6 = vector.extract_strided_slice %4 {offsets = [0, 0], sizes = [8, 1], strides = [1, 1]} : vector<8x10xi32> to vector<8x1xi32>
    %7 = vector.broadcast %6 : vector<8x1xi32> to vector<8x320xi32>
    %8 = arith.cmpi eq, %5, %7 : vector<8x320xi32>
    %9 = vector.extract_strided_slice %4 {offsets = [0, 1], sizes = [8, 1], strides = [1, 1]} : vector<8x10xi32> to vector<8x1xi32>
    %10 = vector.broadcast %9 : vector<8x1xi32> to vector<8x320xi32>
    %11 = arith.cmpi eq, %5, %10 : vector<8x320xi32>
    %12 = arith.ori %8, %11 : vector<8x320xi1>
    %13 = vector.extract_strided_slice %4 {offsets = [0, 2], sizes = [8, 1], strides = [1, 1]} : vector<8x10xi32> to vector<8x1xi32>
    %14 = vector.broadcast %13 : vector<8x1xi32> to vector<8x320xi32>
    %15 = arith.cmpi eq, %5, %14 : vector<8x320xi32>
    %16 = arith.ori %12, %15 : vector<8x320xi1>
    %17 = vector.extract_strided_slice %4 {offsets = [0, 3], sizes = [8, 1], strides = [1, 1]} : vector<8x10xi32> to vector<8x1xi32>
    %18 = vector.broadcast %17 : vector<8x1xi32> to vector<8x320xi32>
    %19 = arith.cmpi eq, %5, %18 : vector<8x320xi32>
    %20 = arith.ori %16, %19 : vector<8x320xi1>
    %21 = vector.extract_strided_slice %4 {offsets = [0, 4], sizes = [8, 1], strides = [1, 1]} : vector<8x10xi32> to vector<8x1xi32>
    %22 = vector.broadcast %21 : vector<8x1xi32> to vector<8x320xi32>
    %23 = arith.cmpi eq, %5, %22 : vector<8x320xi32>
    %24 = arith.ori %20, %23 : vector<8x320xi1>
    %25 = vector.extract_strided_slice %4 {offsets = [0, 5], sizes = [8, 1], strides = [1, 1]} : vector<8x10xi32> to vector<8x1xi32>
    %26 = vector.broadcast %25 : vector<8x1xi32> to vector<8x320xi32>
    %27 = arith.cmpi eq, %5, %26 : vector<8x320xi32>
    %28 = arith.ori %24, %27 : vector<8x320xi1>
    %29 = vector.extract_strided_slice %4 {offsets = [0, 6], sizes = [8, 1], strides = [1, 1]} : vector<8x10xi32> to vector<8x1xi32>
    %30 = vector.broadcast %29 : vector<8x1xi32> to vector<8x320xi32>
    %31 = arith.cmpi eq, %5, %30 : vector<8x320xi32>
    %32 = arith.ori %28, %31 : vector<8x320xi1>
    %33 = vector.extract_strided_slice %4 {offsets = [0, 7], sizes = [8, 1], strides = [1, 1]} : vector<8x10xi32> to vector<8x1xi32>
    %34 = vector.broadcast %33 : vector<8x1xi32> to vector<8x320xi32>
    %35 = arith.cmpi eq, %5, %34 : vector<8x320xi32>
    %36 = arith.ori %32, %35 : vector<8x320xi1>
    %37 = vector.extract_strided_slice %4 {offsets = [0, 8], sizes = [8, 1], strides = [1, 1]} : vector<8x10xi32> to vector<8x1xi32>
    %38 = vector.broadcast %37 : vector<8x1xi32> to vector<8x320xi32>
    %39 = arith.cmpi eq, %5, %38 : vector<8x320xi32>
    %40 = arith.ori %36, %39 : vector<8x320xi1>
    %41 = vector.extract_strided_slice %4 {offsets = [0, 9], sizes = [8, 1], strides = [1, 1]} : vector<8x10xi32> to vector<8x1xi32>
    %42 = vector.broadcast %41 : vector<8x1xi32> to vector<8x320xi32>
    %43 = arith.cmpi eq, %5, %42 : vector<8x320xi32>
    %44 = arith.ori %40, %43 : vector<8x320xi1>
    %45 = arith.extui %44 : vector<8x320xi1> to vector<8x320xi32>
    %46 = arith.sitofp %45 : vector<8x320xi32> to vector<8x320xf32>
    %c0_1 = arith.constant 0 : index
    %c0_2 = arith.constant 0 : index
    %47 = vector.load %arg1[%c0_1, %c0_2] : memref<320x32xf32, #tpu.memory_space<vmem>>, vector<320x32xf32>
    %cst = arith.constant dense<0.000000e+00> : vector<8x32xf32>
    %48 = tpu.matmul %46, %47, %cst {dimension_numbers = #tpu.dot_dimension_numbers<[1], [0], [0], [1], [0, 0, 1, 1], [], []>} : vector<8x320xf32>, vector<320x32xf32>, vector<8x32xf32> -> vector<8x32xf32>
    %c0_3 = arith.constant 0 : index
    %c0_4 = arith.constant 0 : index
    %c0_5 = arith.constant 0 : index
    %49 = vector.load %arg4[%c0_3, %c0_4, %c0_5] : memref<3x1x32xf32, #tpu.memory_space<vmem>>, vector<1x1x32xf32>
    %50 = vector.shape_cast %49 : vector<1x1x32xf32> to vector<1x32xf32>
    %51 = vector.broadcast %50 : vector<1x32xf32> to vector<8x32xf32>
    %52 = arith.addf %48, %51 : vector<8x32xf32>
    %53 = math.sin %52 : vector<8x32xf32>
    %c0_6 = arith.constant 0 : index
    %c0_7 = arith.constant 0 : index
    %c0_8 = arith.constant 0 : index
    %54 = vector.load %arg2[%c0_6, %c0_7, %c0_8] : memref<2x32x32xbf16, #tpu.memory_space<vmem>>, vector<1x32x32xbf16>
    %55 = vector.shape_cast %54 : vector<1x32x32xbf16> to vector<32x32xbf16>
    %56 = arith.extf %55 : vector<32x32xbf16> to vector<32x32xf32>
    %cst_9 = arith.constant dense<0.000000e+00> : vector<8x32xf32>
    %57 = tpu.matmul %53, %56, %cst_9 {dimension_numbers = #tpu.dot_dimension_numbers<[1], [0], [0], [1], [0, 0, 1, 1], [], []>} : vector<8x32xf32>, vector<32x32xf32>, vector<8x32xf32> -> vector<8x32xf32>
    %c1 = arith.constant 1 : index
    %c0_10 = arith.constant 0 : index
    %c0_11 = arith.constant 0 : index
    %58 = vector.load %arg4[%c1, %c0_10, %c0_11] : memref<3x1x32xf32, #tpu.memory_space<vmem>>, vector<1x1x32xf32>
    %59 = vector.shape_cast %58 : vector<1x1x32xf32> to vector<1x32xf32>
    %60 = vector.broadcast %59 : vector<1x32xf32> to vector<8x32xf32>
    %61 = arith.addf %57, %60 : vector<8x32xf32>
    %62 = math.sin %61 : vector<8x32xf32>
    %c1_12 = arith.constant 1 : index
    %c0_13 = arith.constant 0 : index
    %c0_14 = arith.constant 0 : index
    %63 = vector.load %arg2[%c1_12, %c0_13, %c0_14] : memref<2x32x32xbf16, #tpu.memory_space<vmem>>, vector<1x32x32xbf16>
    %64 = vector.shape_cast %63 : vector<1x32x32xbf16> to vector<32x32xbf16>
    %65 = arith.extf %64 : vector<32x32xbf16> to vector<32x32xf32>
    %cst_15 = arith.constant dense<0.000000e+00> : vector<8x32xf32>
    %66 = tpu.matmul %62, %65, %cst_15 {dimension_numbers = #tpu.dot_dimension_numbers<[1], [0], [0], [1], [0, 0, 1, 1], [], []>} : vector<8x32xf32>, vector<32x32xf32>, vector<8x32xf32> -> vector<8x32xf32>
    %c2 = arith.constant 2 : index
    %c0_16 = arith.constant 0 : index
    %c0_17 = arith.constant 0 : index
    %67 = vector.load %arg4[%c2, %c0_16, %c0_17] : memref<3x1x32xf32, #tpu.memory_space<vmem>>, vector<1x1x32xf32>
    %68 = vector.shape_cast %67 : vector<1x1x32xf32> to vector<1x32xf32>
    %69 = vector.broadcast %68 : vector<1x32xf32> to vector<8x32xf32>
    %70 = arith.addf %66, %69 : vector<8x32xf32>
    %71 = math.sin %70 : vector<8x32xf32>
    %c0_18 = arith.constant 0 : index
    %c0_19 = arith.constant 0 : index
    %72 = vector.load %arg3[%c0_18, %c0_19] : memref<32x128xbf16, #tpu.memory_space<vmem>>, vector<32x128xbf16>
    %73 = arith.extf %72 : vector<32x128xbf16> to vector<32x128xf32>
    %cst_20 = arith.constant dense<0.000000e+00> : vector<8x128xf32>
    %74 = tpu.matmul %71, %73, %cst_20 {dimension_numbers = #tpu.dot_dimension_numbers<[1], [0], [0], [1], [0, 0, 1, 1], [], []>} : vector<8x32xf32>, vector<32x128xf32>, vector<8x128xf32> -> vector<8x128xf32>
    %c0_21 = arith.constant 0 : index
    %c0_22 = arith.constant 0 : index
    %75 = vector.load %arg5[%c0_21, %c0_22] : memref<1x128xf32, #tpu.memory_space<vmem>>, vector<1x128xf32>
    %76 = vector.broadcast %75 : vector<1x128xf32> to vector<8x128xf32>
    %77 = arith.addf %74, %76 : vector<8x128xf32>
    %c0_23 = arith.constant 0 : index
    %c0_24 = arith.constant 0 : index
    %78 = vector.load %arg6[%c0_23, %c0_24] : memref<8x128xf32, #tpu.memory_space<vmem>>, vector<8x128xf32>
    tpu.vector_store %arg6[%c0_23, %c0_24], %77 {strides = array<i32>} : memref<8x128xf32, #tpu.memory_space<vmem>>, vector<8x128xf32>,
    return
  }
}

</mosaic_0001>

<llo_original>
// kernel: nextchar_forward.1
$region0: #{nextchar_forward.1}
  #allocation0 [shape = 'u32[]', space=smem, size = 0x4, offset = 0x4, fixed_abs, tag = 'smem constant byte address 0x4 - core index']
  #allocation1 [shape = 'u32[144,128]{1,0:T(1,128)}', space=vmem, size = 0x12000, scoped, tag = 'internal scratch']
  %s0 = inlined_call_operand.vmem [shape: s32[8,10], index: 0, kind: input, shape index: {}]
  %s1 = inlined_call_operand.vmem [shape: f32[320,32], index: 1, kind: input, shape index: {}]
  %s2 = inlined_call_operand.vmem [shape: bf16[2,32,32], index: 2, kind: input, shape index: {}]
  %s3 = inlined_call_operand.vmem [shape: bf16[32,128], index: 3, kind: input, shape index: {}]
  %s4 = inlined_call_operand.vmem [shape: f32[3,1,32], index: 4, kind: input, shape index: {}]
  %s5 = inlined_call_operand.vmem [shape: f32[1,128], index: 5, kind: input, shape index: {}]
  %s6 = inlined_call_operand.hbm [shape: f32[8,128], index: 6, kind: output, shape index: {}]
  %s7 = sld [smem:[#allocation0]]
  $region34: #{nextchar_forward.1} parent=0
    _
  %s9 = ssub.s32 1, %s7
  %s10 = scalar_select 0, %s9, %s7
  $region1: #{nextchar_forward.1} parent=0
    #allocation2 [shape = 'u8[4096]{0}', space=vmem, size = 0x1000, scoped, tag = 'output window, operand 0, single buffered']
    #allocation3 [shape = 's32[1]{0}', space=sflag, size = 0x4, scoped, tag = 'scoped memory for nextchar_forward.1']
    %11 = vsyncpa [#allocation3], 0
    // Predicated region
    $region2: #{nextchar_forward.1} parent=1 // pred_check
      _
    $region3: #{nextchar_forward.1} parent=1 // pred_check_branch
      %13 = sbr.rel (0) target = $region5
    $region4: #{nextchar_forward.1} parent=1 // pred_region
      _
    $region5: #{nextchar_forward.1} parent=1 // pred_fallthru
      _
    // Predicated region
    $region6: #{nextchar_forward.1} parent=1 // pred_check
      _
    $region7: #{nextchar_forward.1} parent=1 // pred_check_branch
      %15 = sbr.rel (0) target = $region9
    $region8: #{nextchar_forward.1} parent=1 // pred_region
      _
    $region9: #{nextchar_forward.1} parent=1 // pred_fallthru
      _
    // Predicated region
    $region10: #{nextchar_forward.1} parent=1 // pred_check
      _
    $region11: #{nextchar_forward.1} parent=1 // pred_check_branch
      %17 = sbr.rel (0) target = $region13
    $region12: #{nextchar_forward.1} parent=1 // pred_region
      _
    $region13: #{nextchar_forward.1} parent=1 // pred_fallthru
      _
    // Predicated region
    $region14: #{nextchar_forward.1} parent=1 // pred_check
      _
    $region15: #{nextchar_forward.1} parent=1 // pred_check_branch
      %19 = sbr.rel (0) target = $region17
    $region16: #{nextchar_forward.1} parent=1 // pred_region
      _
    $region17: #{nextchar_forward.1} parent=1 // pred_fallthru
      _
    // Predicated region
    $region18: #{nextchar_forward.1} parent=1 // pred_check
      _
    $region19: #{nextchar_forward.1} parent=1 // pred_check_branch
      %21 = sbr.rel (0) target = $region21
    $region20: #{nextchar_forward.1} parent=1 // pred_region
      _
    $region21: #{nextchar_forward.1} parent=1 // pred_fallthru
      _
    // Predicated region
    $region22: #{nextchar_forward.1} parent=1 // pred_check
      _
    $region23: #{nextchar_forward.1} parent=1 // pred_check_branch
      %23 = sbr.rel (0) target = $region25
    $region24: #{nextchar_forward.1} parent=1 // pred_region
      _
    $region25: #{nextchar_forward.1} parent=1 // pred_fallthru
      _
    %v24 = vld [vmem:[%s0] sm:$0xff]
    %v25 = vlaneseq
    %v26 = vand.u32 %v25, 127
    %v27 = vmul.u32 %v26, 32
    %v28 = vadd.s32 %v24, %v27
    %v29 = vadd.s32 %v26, 128
    %v30 = vadd.s32 %v26, 256
    %31 = vset.pattern.permute.xlu0 0
    %32 = vperm.xlu0 %31, %v28
    %v33 = vpop.permute.xlu0 %32
    %vm34 = vcmp.eq.s32.totalorder %v26, %v33
    %vm35 = vcmp.eq.s32.totalorder %v29, %v33
    %vm36 = vcmp.eq.s32.totalorder %v30, %v33
    %37 = vset.pattern.permute.xlu0 1
    %38 = vperm.xlu0 %37, %v28
    %v39 = vpop.permute.xlu0 %38
    %vm40 = vcmp.eq.s32.totalorder %v26, %v39
    %vm41 = vcmp.eq.s32.totalorder %v29, %v39
    %vm42 = vcmp.eq.s32.totalorder %v30, %v39
    %vm43 = vmor %vm34, %vm40
    %vm44 = vmor %vm35, %vm41
    %vm45 = vmor %vm36, %vm42
    %46 = vset.pattern.permute.xlu0 2
    %47 = vperm.xlu0 %46, %v28
    %v48 = vpop.permute.xlu0 %47
    %vm49 = vcmp.eq.s32.totalorder %v26, %v48
    %vm50 = vcmp.eq.s32.totalorder %v29, %v48
    %vm51 = vcmp.eq.s32.totalorder %v30, %v48
    %vm52 = vmor %vm43, %vm49
    %vm53 = vmor %vm44, %vm50
    %vm54 = vmor %vm45, %vm51
    %55 = vset.pattern.permute.xlu0 3
    %56 = vperm.xlu0 %55, %v28
    %v57 = vpop.permute.xlu0 %56
    %vm58 = vcmp.eq.s32.totalorder %v26, %v57
    %vm59 = vcmp.eq.s32.totalorder %v29, %v57
    %vm60 = vcmp.eq.s32.totalorder %v30, %v57
    %vm61 = vmor %vm52, %vm58
    %vm62 = vmor %vm53, %vm59
    %vm63 = vmor %vm54, %vm60
    %64 = vset.pattern.permute.xlu0 4
    %65 = vperm.xlu0 %64, %v28
    %v66 = vpop.permute.xlu0 %65
    %vm67 = vcmp.eq.s32.totalorder %v26, %v66
    %vm68 = vcmp.eq.s32.totalorder %v29, %v66
    %vm69 = vcmp.eq.s32.totalorder %v30, %v66
    %vm70 = vmor %vm61, %vm67
    %vm71 = vmor %vm62, %vm68
    %vm72 = vmor %vm63, %vm69
    %73 = vset.pattern.permute.xlu0 5
    %74 = vperm.xlu0 %73, %v28
    %v75 = vpop.permute.xlu0 %74
    %vm76 = vcmp.eq.s32.totalorder %v26, %v75
    %vm77 = vcmp.eq.s32.totalorder %v29, %v75
    %vm78 = vcmp.eq.s32.totalorder %v30, %v75
    %vm79 = vmor %vm70, %vm76
    %vm80 = vmor %vm71, %vm77
    %vm81 = vmor %vm72, %vm78
    %82 = vset.pattern.permute.xlu0 6
    %83 = vperm.xlu0 %82, %v28
    %v84 = vpop.permute.xlu0 %83
    %vm85 = vcmp.eq.s32.totalorder %v26, %v84
    %vm86 = vcmp.eq.s32.totalorder %v29, %v84
    %vm87 = vcmp.eq.s32.totalorder %v30, %v84
    %vm88 = vmor %vm79, %vm85
    %vm89 = vmor %vm80, %vm86
    %vm90 = vmor %vm81, %vm87
    %91 = vset.pattern.permute.xlu0 7
    %92 = vperm.xlu0 %91, %v28
    %v93 = vpop.permute.xlu0 %92
    %vm94 = vcmp.eq.s32.totalorder %v26, %v93
    %vm95 = vcmp.eq.s32.totalorder %v29, %v93
    %vm96 = vcmp.eq.s32.totalorder %v30, %v93
    %vm97 = vmor %vm88, %vm94
    %vm98 = vmor %vm89, %vm95
    %vm99 = vmor %vm90, %vm96
    %100 = vset.pattern.permute.xlu0 8
    %101 = vperm.xlu0 %100, %v28
    %v102 = vpop.permute.xlu0 %101
    %vm103 = vcmp.eq.s32.totalorder %v26, %v102
    %vm104 = vcmp.eq.s32.totalorder %v29, %v102
    %vm105 = vcmp.eq.s32.totalorder %v30, %v102
    %vm106 = vmor %vm97, %vm103
    %vm107 = vmor %vm98, %vm104
    %vm108 = vmor %vm99, %vm105
    %109 = vset.pattern.permute.xlu0 9
    %110 = vperm.xlu0 %109, %v28
    %v111 = vpop.permute.xlu0 %110
    %vm112 = vcmp.eq.s32.totalorder %v26, %v111
    %vm113 = vcmp.eq.s32.totalorder %v29, %v111
    %vm114 = vcmp.eq.s32.totalorder %v30, %v111
    %vm115 = vmor %vm106, %vm112
    %vm116 = vmor %vm107, %vm113
    %vm117 = vmor %vm108, %vm114
    %v118 = vsel %vm115, 1, 0
    %v119 = vsel %vm116, 1, 0
    %v120 = vsel %vm117, 1, 0
    %v121 = vcvt.s32.f32 %v118
    %v122 = vcvt.s32.f32 %v119
    %v123 = vcvt.s32.f32 %v120
    %v124 = vld [vmem:[%s1] sm:$0xff]
    %v125 = vld [vmem:[%s1 + $0x8] sm:$0xff]
    %v126 = vld [vmem:[%s1 + $0x10] sm:$0xff]
    %v127 = vld [vmem:[%s1 + $0x18] sm:$0xff]
    %v128 = vld [vmem:[%s1 + $0x20] sm:$0xff]
    %v129 = vld [vmem:[%s1 + $0x28] sm:$0xff]
    %v130 = vld [vmem:[%s1 + $0x30] sm:$0xff]
    %v131 = vld [vmem:[%s1 + $0x38] sm:$0xff]
    %v132 = vld [vmem:[%s1 + $0x40] sm:$0xff]
    %v133 = vld [vmem:[%s1 + $0x48] sm:$0xff]
    %v134 = vld [vmem:[%s1 + $0x50] sm:$0xff]
    %v135 = vld [vmem:[%s1 + $0x58] sm:$0xff]
    %v136 = vld [vmem:[%s1 + $0x60] sm:$0xff]
    %v137 = vld [vmem:[%s1 + $0x68] sm:$0xff]
    %v138 = vld [vmem:[%s1 + $0x70] sm:$0xff]
    %v139 = vld [vmem:[%s1 + $0x78] sm:$0xff]
    %v140 = vld [vmem:[%s1 + $0x80] sm:$0xff]
    %v141 = vld [vmem:[%s1 + $0x88] sm:$0xff]
    %v142 = vld [vmem:[%s1 + $0x90] sm:$0xff]
    %v143 = vld [vmem:[%s1 + $0x98] sm:$0xff]
    %v144 = vld [vmem:[%s1 + $0xa0] sm:$0xff]
    %v145 = vld [vmem:[%s1 + $0xa8] sm:$0xff]
    %v146 = vld [vmem:[%s1 + $0xb0] sm:$0xff]
    %v147 = vld [vmem:[%s1 + $0xb8] sm:$0xff]
    %v148 = vld [vmem:[%s1 + $0xc0] sm:$0xff]
    %v149 = vld [vmem:[%s1 + $0xc8] sm:$0xff]
    %v150 = vld [vmem:[%s1 + $0xd0] sm:$0xff]
    %v151 = vld [vmem:[%s1 + $0xd8] sm:$0xff]
    %v152 = vld [vmem:[%s1 + $0xe0] sm:$0xff]
    %v153 = vld [vmem:[%s1 + $0xe8] sm:$0xff]
    %v154 = vld [vmem:[%s1 + $0xf0] sm:$0xff]
    %v155 = vld [vmem:[%s1 + $0xf8] sm:$0xff]
    %v156 = vld [vmem:[%s1 + $0x100] sm:$0xff]
    %v157 = vld [vmem:[%s1 + $0x108] sm:$0xff]
    %v158 = vld [vmem:[%s1 + $0x110] sm:$0xff]
    %v159 = vld [vmem:[%s1 + $0x118] sm:$0xff]
    %v160 = vld [vmem:[%s1 + $0x120] sm:$0xff]
    %v161 = vld [vmem:[%s1 + $0x128] sm:$0xff]
    %v162 = vld [vmem:[%s1 + $0x130] sm:$0xff]
    %v163 = vld [vmem:[%s1 + $0x138] sm:$0xff]
    %v164 = vld [vmem:[%s4] sm:$0x1]
    %v166 = vlaneseq
    %v167 = vshrl.u32 %v166, 7
    %v168 = vsub.s32 0, %v167
    %v169 = vrot.slane %v164, %v168
    %vm171 = vcmask 523264
    %v173 = vsel %vm171, %v123, 0
    %175 = vmatprep.subr.mxu0 0.0
    %176 = vmatpush1.msra.mxu0 %v124
    %177 = vmatprep.subr.mxu0 0.0
    %178 = vmatpush1.msra.mxu0 %v125
    %179 = vmatprep.subr.mxu0 0.0
    %180 = vmatpush1.msra.mxu0 %v126
    %181 = vmatprep.subr.mxu0 0.0
    %182 = vmatpush1.msra.mxu0 %v127
    %183 = vmatprep.subr.mxu0 0.0
    %184 = vmatpush1.msra.mxu0 %v128
    %185 = vmatprep.subr.mxu0 0.0
    %186 = vmatpush1.msra.mxu0 %v129
    %187 = vmatprep.subr.mxu0 0.0
    %188 = vmatpush1.msra.mxu0 %v130
    %189 = vmatprep.subr.mxu0 0.0
    %190 = vmatpush1.msra.mxu0 %v131
    %191 = vmatprep.subr.mxu0 0.0
    %192 = vmatpush1.msra.mxu0 %v132
    %193 = vmatprep.subr.mxu0 0.0
    %194 = vmatpush1.msra.mxu0 %v133
    %195 = vmatprep.subr.mxu0 0.0
    %196 = vmatpush1.msra.mxu0 %v134
    %197 = vmatprep.subr.mxu0 0.0
    %198 = vmatpush1.msra.mxu0 %v135
    %199 = vmatprep.subr.mxu0 0.0
    %200 = vmatpush1.msra.mxu0 %v136
    %201 = vmatprep.subr.mxu0 0.0
    %202 = vmatpush1.msra.mxu0 %v137
    %203 = vmatprep.subr.mxu0 0.0
    %204 = vmatpush1.msra.mxu0 %v138
    %205 = vmatprep.subr.mxu0 0.0
    %206 = vmatpush1.msra.mxu0 %v139
    %207 = vmatprep.subr.mxu0 0.0
    %208 = vmatpush1.msra.mxu0 %v140
    %209 = vmatprep.subr.mxu0 0.0
    %210 = vmatpush1.msra.mxu0 %v141
    %211 = vmatprep.subr.mxu0 0.0
    %212 = vmatpush1.msra.mxu0 %v142
    %213 = vmatprep.subr.mxu0 0.0
    %214 = vmatpush1.msra.mxu0 %v143
    %215 = vmatprep.subr.mxu0 0.0
    %216 = vmatpush1.msra.mxu0 %v144
    %217 = vmatprep.subr.mxu0 0.0
    %218 = vmatpush1.msra.mxu0 %v145
    %219 = vmatprep.subr.mxu0 0.0
    %220 = vmatpush1.msra.mxu0 %v146
    %221 = vmatprep.subr.mxu0 0.0
    %222 = vmatpush1.msra.mxu0 %v147
    %223 = vmatprep.subr.mxu0 0.0
    %224 = vmatpush1.msra.mxu0 %v148
    %225 = vmatprep.subr.mxu0 0.0
    %226 = vmatpush1.msra.mxu0 %v149
    %227 = vmatprep.subr.mxu0 0.0
    %228 = vmatpush1.msra.mxu0 %v150
    %229 = vmatprep.subr.mxu0 0.0
    %230 = vmatpush1.msra.mxu0 %v151
    %231 = vmatprep.subr.mxu0 0.0
    %232 = vmatpush1.msra.mxu0 %v152
    %233 = vmatprep.subr.mxu0 0.0
    %234 = vmatpush1.msra.mxu0 %v153
    %235 = vmatprep.subr.mxu0 0.0
    %236 = vmatpush1.msra.mxu0 %v154
    %237 = vmatprep.subr.mxu0 0.0
    %238 = vmatpush1.msra.mxu0 %v155
    %239 = vmatprep.mubr.f32.mxu0 %v122
    %240 = vmatmul.mubr.f32.gmra.mrb[0].mxu0 %v121
    %v241 = vpop.f32.mrb[0].mxu0
    %v242 = vadd.f32 %v169, %v241
    %v243 = vpop.f32.mrb[0].mxu0
    %244 = vdwg.mxu0
    %245 = vmatprep.subr.mxu0 0.0
    %246 = vmatpush1.msra.mxu0 %v156
    %247 = vmatprep.subr.mxu0 0.0
    %248 = vmatpush1.msra.mxu0 %v157
    %249 = vmatprep.subr.mxu0 0.0
    %250 = vmatpush1.msra.mxu0 %v158
    %251 = vmatprep.subr.mxu0 0.0
    %252 = vmatpush1.msra.mxu0 %v159
    %253 = vmatprep.subr.mxu0 0.0
    %254 = vmatpush1.msra.mxu0 %v160
    %255 = vmatprep.subr.mxu0 0.0
    %256 = vmatpush1.msra.mxu0 %v161
    %257 = vmatprep.subr.mxu0 0.0
    %258 = vmatpush1.msra.mxu0 %v162
    %259 = vmatprep.subr.mxu0 0.0
    %260 = vmatpush1.msra.mxu0 %v163
    %261 = vmatprep.subr.mxu0 0.0
    %262 = vmatpush1.msra.mxu0 0.0
    %263 = vmatprep.subr.mxu0 0.0
    %264 = vmatpush1.msra.mxu0 0.0
    %265 = vmatprep.subr.mxu0 0.0
    %266 = vmatpush1.msra.mxu0 0.0
    %267 = vmatprep.subr.mxu0 0.0
    %268 = vmatpush1.msra.mxu0 0.0
    %269 = vmatprep.subr.mxu0 0.0
    %270 = vmatpush1.msra.mxu0 0.0
    %271 = vmatprep.subr.mxu0 0.0
    %272 = vmatpush1.msra.mxu0 0.0
    %273 = vmatprep.subr.mxu0 0.0
    %274 = vmatpush1.msra.mxu0 0.0
    %275 = vmatprep.subr.mxu0 0.0
    %276 = vmatpush1.msra.mxu0 0.0
    %277 = vmatprep.subr.mxu0 0.0
    %278 = vmatpush1.msra.mxu0 0.0
    %279 = vmatprep.subr.mxu0 0.0
    %280 = vmatpush1.msra.mxu0 0.0
    %281 = vmatprep.subr.mxu0 0.0
    %282 = vmatpush1.msra.mxu0 0.0
    %283 = vmatprep.subr.mxu0 0.0
    %284 = vmatpush1.msra.mxu0 0.0
    %285 = vmatprep.subr.mxu0 0.0
    %286 = vmatpush1.msra.mxu0 0.0
    %287 = vmatprep.subr.mxu0 0.0
    %288 = vmatpush1.msra.mxu0 0.0
    %289 = vmatprep.subr.mxu0 0.0
    %290 = vmatpush1.msra.mxu0 0.0
    %291 = vmatprep.subr.mxu0 0.0
    %292 = vmatpush1.msra.mxu0 0.0
    %293 = vmatprep.subr.mxu0 0.0
    %294 = vmatpush1.msra.mxu0 0.0
    %295 = vmatprep.subr.mxu0 0.0
    %296 = vmatpush1.msra.mxu0 0.0
    %297 = vmatprep.subr.mxu0 0.0
    %298 = vmatpush1.msra.mxu0 0.0
    %299 = vmatprep.subr.mxu0 0.0
    %300 = vmatpush1.msra.mxu0 0.0
    %301 = vmatprep.subr.mxu0 0.0
    %302 = vmatpush1.msra.mxu0 0.0
    %303 = vmatprep.subr.mxu0 0.0
    %304 = vmatpush1.msra.mxu0 0.0
    %305 = vmatprep.subr.mxu0 0.0
    %306 = vmatpush1.msra.mxu0 0.0
    %307 = vmatprep.subr.mxu0 0.0
    %308 = vmatpush1.msra.mxu0 0.0
    %309 = vmatprep.mubr.f32.mxu0 0.0
    %310 = vmatmul.mubr.f32.gmra.mrb[0].mxu0 %v173
    %v311 = vpop.f32.mrb[0].mxu0
    %v312 = vadd.f32 %v242, %v311
    %v313 = vpop.f32.mrb[0].mxu0
    %314 = vdwg.mxu0
    %v315 = vand.u32 2147483647, %v312
    %vm316 = vcmp.le.f32.partialorder %v315, 0.7853982
    %vm317 = vcmp.lt.s32.totalorder %v312, 0
    %v318 = vand.u32 %v312, 2139095040
    %v319 = vshrl.u32 %v318, 23
    %v320 = vsub.s32 %v319, 127
    %v321 = vand.u32 2147483647, %v312
    %v322 = vand.u32 %v321, 8388607
    %v323 = vor.u32 %v322, 8388608
    %v324 = vsub.s32 0, %v323
    %v325 = vadd.s32 %v320, 1
    %vm326 = vcmp.gt.s32.totalorder %v325, 0
    %v327 = vsel %vm326, %v325, 0
    %v328 = vshrl.u32 %v327, 5
    %v329 = vand.u32 %v327, 31
    %v330 = vsub.s32 32, %v329
    %v331 = vshrl.u32 683565275, %v330
    %v332 = vshll.u32 683565275, %v329
    %v333 = vshrl.u32 2475754826, %v330
    %v334 = vor.u32 %v332, %v333
    %v335 = vshll.u32 2475754826, %v329
    %v336 = vshrl.u32 2131351028, %v330
    %v337 = vor.u32 %v335, %v336
    %v338 = vshll.u32 2131351028, %v329
    %v339 = vshrl.u32 2102212464, %v330
    %v340 = vor.u32 %v338, %v339
    %v341 = vshll.u32 2102212464, %v329
    %v342 = vshrl.u32 920167782, %v330
    %v343 = vor.u32 %v341, %v342
    %v344 = vshll.u32 920167782, %v329
    %v345 = vshrl.u32 1326507024, %v330
    %v346 = vor.u32 %v344, %v345
    %vm347 = vcmp.lt.s32.totalorder %v328, 1
    %vm348 = vcmp.lt.s32.totalorder %v328, 2
    %vm349 = vcmp.lt.s32.totalorder %v328, 3
    %vm350 = vcmp.lt.s32.totalorder %v328, 4
    %v351 = vsel %vm347, %v331, %v334
    %v352 = vsel %vm350, %v340, 2102212464
    %v353 = vsel %vm349, %v337, %v352
    %v354 = vsel %vm348, %v351, %v353
    %v355 = vsel %vm347, %v334, %v337
    %v356 = vsel %vm350, %v343, 920167782
    %v357 = vsel %vm349, %v340, %v356
    %v358 = vsel %vm348, %v355, %v357
    %v359 = vsel %vm347, %v337, %v340
    %v360 = vsel %vm350, %v346, 1326507024
    %v361 = vsel %vm349, %v343, %v360
    %v362 = vsel %vm348, %v359, %v361
    %v363 = vshll.u32 %v323, 8
    %v364 = vmul.u32.u64.compose %v363, %v362
    %v365 = vextract.low.u32 %v364
    %v366 = vextract.high.u32 %v364
    %v367 = vmul.u32.u64.compose %v363, %v358
    %v368 = vextract.low.u32 %v367
    %v369 = vextract.high.u32 %v367
    %v370 = vmul.u32 %v363, %v354
    %v371 = vadd.s32 %v366, %v368
    %vm372 = vc.u32 %v366, %v368
    %v373 = vadd.s32 %v369, 1
    %v374 = vsel %vm372, %v373, %v369
    %v375 = vadd.s32 %v370, %v374
    %v376 = vadd.s32 %v375, 536870912
    %v377 = vshrl.u32 %v376, 30
    %v378 = vshll.u32 %v377, 30
    %v379 = vsub.s32 %v375, %v378
    %vm380 = vcmp.lt.s32.totalorder %v379, 0
    %v381 = vsub.s32 0, %v379
    %v382 = vsel %vm380, %v381, %v379
    %v383 = vclz %v382
    %v384 = vsub.s32 %v383, 2
    %vm385 = vcmp.gt.s32.totalorder 0, %v384
    %v386 = vsel %vm385, 0, %v384
    %v387 = vsub.s32 32, %v386
    %v388 = vshll.u32 %v379, %v386
    %v389 = vshrl.u32 %v371, %v387
    %v390 = vor.u32 %v388, %v389
    %v391 = vsub.s32 4294967266, %v386
    %v392 = vadd.s32 %v391, 127
    %v393 = vshll.u32 %v392, 23
    %v394 = vor.u32 4788187, %v393
    %v395 = vand.u32 2147483647, %v394
    %v397 = vcvt.s32.f32 %v390
    %v398 = vmul.f32 %v397, %v395
    %v399 = vxor.u32 %v398, 2147483648
    %v400 = vsel %vm317, %v399, %v398
    %v401 = vsub.s32 4, %v377
    %v402 = vsel %vm317, %v401, %v377
    %v403 = vsel %vm316, %v312, %v400
    %v404 = vsel %vm316, 0, %v402
    %v405 = vcosq.f32.pop %v403
    %v406 = vsinq.f32.pop %v403
    %vm407 = vweird.f32 %v312
    %v408 = vadd.s32 %v404, 3
    %v409 = vand.u32 %v408, 3
    %vm410 = vcmp.lt.s32.totalorder %v409, 2
    %vm411 = vcmp.eq.s32.totalorder %v409, 0
    %v412 = vxor.u32 %v406, 2147483648
    %v413 = vsel %vm411, %v405, %v412
    %vm414 = vcmp.eq.s32.totalorder %v409, 2
    %v415 = vxor.u32 %v405, 2147483648
    %v416 = vsel %vm414, %v415, %v406
    %v417 = vsel %vm410, %v413, %v416
    %v418 = vsel %vm407, nan, %v417
    %v419 = vld [vmem:[%s2] sm:$0xf]
    %v420 = vld [vmem:[%s2 + $0x4] sm:$0xf]
    %v421 = vld [vmem:[%s2 + $0x8] sm:$0xf]
    %v422 = vld [vmem:[%s2 + $0xc] sm:$0xf]
    %v423 = vunpack.c.l.bf16 %v419
    %v424 = vunpack.c.l.bf16 %v420
    %v425 = vunpack.c.l.bf16 %v421
    %v426 = vunpack.c.l.bf16 %v422
    %s427 = scalar_lea.vmem %s4, 1
    %v428 = vld [vmem:[%s427] sm:$0x1]
    %v430 = vlaneseq
    %v431 = vshrl.u32 %v430, 7
    %v432 = vsub.s32 0, %v431
    %v433 = vrot.slane %v428, %v432
    %vm435 = vcmask 261120
    %v437 = vsel %vm435, %v418, 0
    %439 = vmatprep.subr.mxu0 0.0
    %440 = vmatpush1.msra.mxu0 %v423
    %441 = vmatprep.subr.mxu0 0.0
    %442 = vmatpush1.msra.mxu0 %v424
    %443 = vmatprep.subr.mxu0 0.0
    %444 = vmatpush1.msra.mxu0 %v425
    %445 = vmatprep.subr.mxu0 0.0
    %446 = vmatpush1.msra.mxu0 %v426
    %447 = vmatprep.subr.mxu0 0.0
    %448 = vmatpush1.msra.mxu0 0.0
    %449 = vmatprep.subr.mxu0 0.0
    %450 = vmatpush1.msra.mxu0 0.0
    %451 = vmatprep.subr.mxu0 0.0
    %452 = vmatpush1.msra.mxu0 0.0
    %453 = vmatprep.subr.mxu0 0.0
    %454 = vmatpush1.msra.mxu0 0.0
    %455 = vmatprep.subr.mxu0 0.0
    %456 = vmatpush1.msra.mxu0 0.0
    %457 = vmatprep.subr.mxu0 0.0
    %458 = vmatpush1.msra.mxu0 0.0
    %459 = vmatprep.subr.mxu0 0.0
    %460 = vmatpush1.msra.mxu0 0.0
    %461 = vmatprep.subr.mxu0 0.0
    %462 = vmatpush1.msra.mxu0 0.0
    %463 = vmatprep.subr.mxu0 0.0
    %464 = vmatpush1.msra.mxu0 0.0
    %465 = vmatprep.subr.mxu0 0.0
    %466 = vmatpush1.msra.mxu0 0.0
    %467 = vmatprep.subr.mxu0 0.0
    %468 = vmatpush1.msra.mxu0 0.0
    %469 = vmatprep.subr.mxu0 0.0
    %470 = vmatpush1.msra.mxu0 0.0
    %471 = vmatprep.subr.mxu0 0.0
    %472 = vmatpush1.msra.mxu0 0.0
    %473 = vmatprep.subr.mxu0 0.0
    %474 = vmatpush1.msra.mxu0 0.0
    %475 = vmatprep.subr.mxu0 0.0
    %476 = vmatpush1.msra.mxu0 0.0
    %477 = vmatprep.subr.mxu0 0.0
    %478 = vmatpush1.msra.mxu0 0.0
    %479 = vmatprep.subr.mxu0 0.0
    %480 = vmatpush1.msra.mxu0 0.0
    %481 = vmatprep.subr.mxu0 0.0
    %482 = vmatpush1.msra.mxu0 0.0
    %483 = vmatprep.subr.mxu0 0.0
    %484 = vmatpush1.msra.mxu0 0.0
    %485 = vmatprep.subr.mxu0 0.0
    %486 = vmatpush1.msra.mxu0 0.0
    %487 = vmatprep.subr.mxu0 0.0
    %488 = vmatpush1.msra.mxu0 0.0
    %489 = vmatprep.subr.mxu0 0.0
    %490 = vmatpush1.msra.mxu0 0.0
    %491 = vmatprep.subr.mxu0 0.0
    %492 = vmatpush1.msra.mxu0 0.0
    %493 = vmatprep.subr.mxu0 0.0
    %494 = vmatpush1.msra.mxu0 0.0
    %495 = vmatprep.subr.mxu0 0.0
    %496 = vmatpush1.msra.mxu0 0.0
    %497 = vmatprep.subr.mxu0 0.0
    %498 = vmatpush1.msra.mxu0 0.0
    %499 = vmatprep.subr.mxu0 0.0
    %500 = vmatpush1.msra.mxu0 0.0
    %501 = vmatprep.subr.mxu0 0.0
    %502 = vmatpush1.msra.mxu0 0.0
    %503 = vmatprep.mubr.f32.mxu0 0.0
    %504 = vmatmul.mubr.f32.gmra.mrb[0].mxu0 %v437
    %v505 = vpop.f32.mrb[0].mxu0
    %v506 = vadd.f32 %v433, %v505
    %v507 = vpop.f32.mrb[0].mxu0
    %508 = vdwg.mxu0
    %v509 = vand.u32 2147483647, %v506
    %vm510 = vcmp.le.f32.partialorder %v509, 0.7853982
    %vm511 = vcmp.lt.s32.totalorder %v506, 0
    %v512 = vand.u32 %v506, 2139095040
    %v513 = vshrl.u32 %v512, 23
    %v514 = vsub.s32 %v513, 127
    %v515 = vand.u32 2147483647, %v506
    %v516 = vand.u32 %v515, 8388607
    %v517 = vor.u32 %v516, 8388608
    %v518 = vsub.s32 0, %v517
    %v519 = vadd.s32 %v514, 1
    %vm520 = vcmp.gt.s32.totalorder %v519, 0
    %v521 = vsel %vm520, %v519, 0
    %v522 = vshrl.u32 %v521, 5
    %v523 = vand.u32 %v521, 31
    %v524 = vsub.s32 32, %v523
    %v525 = vshrl.u32 683565275, %v524
    %v526 = vshll.u32 683565275, %v523
    %v527 = vshrl.u32 2475754826, %v524
    %v528 = vor.u32 %v526, %v527
    %v529 = vshll.u32 2475754826, %v523
    %v530 = vshrl.u32 2131351028, %v524
    %v531 = vor.u32 %v529, %v530
    %v532 = vshll.u32 2131351028, %v523
    %v533 = vshrl.u32 2102212464, %v524
    %v534 = vor.u32 %v532, %v533
    %v535 = vshll.u32 2102212464, %v523
    %v536 = vshrl.u32 920167782, %v524
    %v537 = vor.u32 %v535, %v536
    %v538 = vshll.u32 920167782, %v523
    %v539 = vshrl.u32 1326507024, %v524
    %v540 = vor.u32 %v538, %v539
    %vm541 = vcmp.lt.s32.totalorder %v522, 1
    %vm542 = vcmp.lt.s32.totalorder %v522, 2
    %vm543 = vcmp.lt.s32.totalorder %v522, 3
    %vm544 = vcmp.lt.s32.totalorder %v522, 4
    %v545 = vsel %vm541, %v525, %v528
    %v546 = vsel %vm544, %v534, 2102212464
    %v547 = vsel %vm543, %v531, %v546
    %v548 = vsel %vm542, %v545, %v547
    %v549 = vsel %vm541, %v528, %v531
    %v550 = vsel %vm544, %v537, 920167782
    %v551 = vsel %vm543, %v534, %v550
    %v552 = vsel %vm542, %v549, %v551
    %v553 = vsel %vm541, %v531, %v534
    %v554 = vsel %vm544, %v540, 1326507024
    %v555 = vsel %vm543, %v537, %v554
    %v556 = vsel %vm542, %v553, %v555
    %v557 = vshll.u32 %v517, 8
    %v558 = vmul.u32.u64.compose %v557, %v556
    %v559 = vextract.low.u32 %v558
    %v560 = vextract.high.u32 %v558
    %v561 = vmul.u32.u64.compose %v557, %v552
    %v562 = vextract.low.u32 %v561
    %v563 = vextract.high.u32 %v561
    %v564 = vmul.u32 %v557, %v548
    %v565 = vadd.s32 %v560, %v562
    %vm566 = vc.u32 %v560, %v562
    %v567 = vadd.s32 %v563, 1
    %v568 = vsel %vm566, %v567, %v563
    %v569 = vadd.s32 %v564, %v568
    %v570 = vadd.s32 %v569, 536870912
    %v571 = vshrl.u32 %v570, 30
    %v572 = vshll.u32 %v571, 30
    %v573 = vsub.s32 %v569, %v572
    %vm574 = vcmp.lt.s32.totalorder %v573, 0
    %v575 = vsub.s32 0, %v573
    %v576 = vsel %vm574, %v575, %v573
    %v577 = vclz %v576
    %v578 = vsub.s32 %v577, 2
    %vm579 = vcmp.gt.s32.totalorder 0, %v578
    %v580 = vsel %vm579, 0, %v578
    %v581 = vsub.s32 32, %v580
    %v582 = vshll.u32 %v573, %v580
    %v583 = vshrl.u32 %v565, %v581
    %v584 = vor.u32 %v582, %v583
    %v585 = vsub.s32 4294967266, %v580
    %v586 = vadd.s32 %v585, 127
    %v587 = vshll.u32 %v586, 23
    %v588 = vor.u32 4788187, %v587
    %v589 = vand.u32 2147483647, %v588
    %v591 = vcvt.s32.f32 %v584
    %v592 = vmul.f32 %v591, %v589
    %v593 = vxor.u32 %v592, 2147483648
    %v594 = vsel %vm511, %v593, %v592
    %v595 = vsub.s32 4, %v571
    %v596 = vsel %vm511, %v595, %v571
    %v597 = vsel %vm510, %v506, %v594
    %v598 = vsel %vm510, 0, %v596
    %v599 = vcosq.f32.pop %v597
    %v600 = vsinq.f32.pop %v597
    %vm601 = vweird.f32 %v506
    %v602 = vadd.s32 %v598, 3
    %v603 = vand.u32 %v602, 3
    %vm604 = vcmp.lt.s32.totalorder %v603, 2
    %vm605 = vcmp.eq.s32.totalorder %v603, 0
    %v606 = vxor.u32 %v600, 2147483648
    %v607 = vsel %vm605, %v599, %v606
    %vm608 = vcmp.eq.s32.totalorder %v603, 2
    %v609 = vxor.u32 %v599, 2147483648
    %v610 = vsel %vm608, %v609, %v600
    %v611 = vsel %vm604, %v607, %v610
    %v612 = vsel %vm601, nan, %v611
    %s613 = scalar_lea.vmem %s2, 16
    %v614 = vld [vmem:[%s613] sm:$0xf]
    %v615 = vld [vmem:[%s613 + $0x4] sm:$0xf]
    %v616 = vld [vmem:[%s613 + $0x8] sm:$0xf]
    %v617 = vld [vmem:[%s613 + $0xc] sm:$0xf]
    %v618 = vunpack.c.l.bf16 %v614
    %v619 = vunpack.c.l.bf16 %v615
    %v620 = vunpack.c.l.bf16 %v616
    %v621 = vunpack.c.l.bf16 %v617
    %s622 = scalar_lea.vmem %s4, 2
    %v623 = vld [vmem:[%s622] sm:$0x1]
    %v625 = vlaneseq
    %v626 = vshrl.u32 %v625, 7
    %v627 = vsub.s32 0, %v626
    %v628 = vrot.slane %v623, %v627
    %v631 = vsel %vm435, %v612, 0
    %633 = vmatprep.subr.mxu0 0.0
    %634 = vmatpush1.msra.mxu0 %v618
    %635 = vmatprep.subr.mxu0 0.0
    %636 = vmatpush1.msra.mxu0 %v619
    %637 = vmatprep.subr.mxu0 0.0
    %638 = vmatpush1.msra.mxu0 %v620
    %639 = vmatprep.subr.mxu0 0.0
    %640 = vmatpush1.msra.mxu0 %v621
    %641 = vmatprep.subr.mxu0 0.0
    %642 = vmatpush1.msra.mxu0 0.0
    %643 = vmatprep.subr.mxu0 0.0
    %644 = vmatpush1.msra.mxu0 0.0
    %645 = vmatprep.subr.mxu0 0.0
    %646 = vmatpush1.msra.mxu0 0.0
    %647 = vmatprep.subr.mxu0 0.0
    %648 = vmatpush1.msra.mxu0 0.0
    %649 = vmatprep.subr.mxu0 0.0
    %650 = vmatpush1.msra.mxu0 0.0
    %651 = vmatprep.subr.mxu0 0.0
    %652 = vmatpush1.msra.mxu0 0.0
    %653 = vmatprep.subr.mxu0 0.0
    %654 = vmatpush1.msra.mxu0 0.0
    %655 = vmatprep.subr.mxu0 0.0
    %656 = vmatpush1.msra.mxu0 0.0
    %657 = vmatprep.subr.mxu0 0.0
    %658 = vmatpush1.msra.mxu0 0.0
    %659 = vmatprep.subr.mxu0 0.0
    %660 = vmatpush1.msra.mxu0 0.0
    %661 = vmatprep.subr.mxu0 0.0
    %662 = vmatpush1.msra.mxu0 0.0
    %663 = vmatprep.subr.mxu0 0.0
    %664 = vmatpush1.msra.mxu0 0.0
    %665 = vmatprep.subr.mxu0 0.0
    %666 = vmatpush1.msra.mxu0 0.0
    %667 = vmatprep.subr.mxu0 0.0
    %668 = vmatpush1.msra.mxu0 0.0
    %669 = vmatprep.subr.mxu0 0.0
    %670 = vmatpush1.msra.mxu0 0.0
    %671 = vmatprep.subr.mxu0 0.0
    %672 = vmatpush1.msra.mxu0 0.0
    %673 = vmatprep.subr.mxu0 0.0
    %674 = vmatpush1.msra.mxu0 0.0
    %675 = vmatprep.subr.mxu0 0.0
    %676 = vmatpush1.msra.mxu0 0.0
    %677 = vmatprep.subr.mxu0 0.0
    %678 = vmatpush1.msra.mxu0 0.0
    %679 = vmatprep.subr.mxu0 0.0
    %680 = vmatpush1.msra.mxu0 0.0
    %681 = vmatprep.subr.mxu0 0.0
    %682 = vmatpush1.msra.mxu0 0.0
    %683 = vmatprep.subr.mxu0 0.0
    %684 = vmatpush1.msra.mxu0 0.0
    %685 = vmatprep.subr.mxu0 0.0
    %686 = vmatpush1.msra.mxu0 0.0
    %687 = vmatprep.subr.mxu0 0.0
    %688 = vmatpush1.msra.mxu0 0.0
    %689 = vmatprep.subr.mxu0 0.0
    %690 = vmatpush1.msra.mxu0 0.0
    %691 = vmatprep.subr.mxu0 0.0
    %692 = vmatpush1.msra.mxu0 0.0
    %693 = vmatprep.subr.mxu0 0.0
    %694 = vmatpush1.msra.mxu0 0.0
    %695 = vmatprep.subr.mxu0 0.0
    %696 = vmatpush1.msra.mxu0 0.0
    %697 = vmatprep.mubr.f32.mxu0 0.0
    %698 = vmatmul.mubr.f32.gmra.mrb[0].mxu0 %v631
    %v699 = vpop.f32.mrb[0].mxu0
    %v700 = vadd.f32 %v628, %v699
    %v701 = vpop.f32.mrb[0].mxu0
    %702 = vdwg.mxu0
    %v703 = vand.u32 2147483647, %v700
    %vm704 = vcmp.le.f32.partialorder %v703, 0.7853982
    %vm705 = vcmp.lt.s32.totalorder %v700, 0
    %v706 = vand.u32 %v700, 2139095040
    %v707 = vshrl.u32 %v706, 23
    %v708 = vsub.s32 %v707, 127
    %v709 = vand.u32 2147483647, %v700
    %v710 = vand.u32 %v709, 8388607
    %v711 = vor.u32 %v710, 8388608
    %v712 = vsub.s32 0, %v711
    %v713 = vadd.s32 %v708, 1
    %vm714 = vcmp.gt.s32.totalorder %v713, 0
    %v715 = vsel %vm714, %v713, 0
    %v716 = vshrl.u32 %v715, 5
    %v717 = vand.u32 %v715, 31
    %v718 = vsub.s32 32, %v717
    %v719 = vshrl.u32 683565275, %v718
    %v720 = vshll.u32 683565275, %v717
    %v721 = vshrl.u32 2475754826, %v718
    %v722 = vor.u32 %v720, %v721
    %v723 = vshll.u32 2475754826, %v717
    %v724 = vshrl.u32 2131351028, %v718
    %v725 = vor.u32 %v723, %v724
    %v726 = vshll.u32 2131351028, %v717
    %v727 = vshrl.u32 2102212464, %v718
    %v728 = vor.u32 %v726, %v727
    %v729 = vshll.u32 2102212464, %v717
    %v730 = vshrl.u32 920167782, %v718
    %v731 = vor.u32 %v729, %v730
    %v732 = vshll.u32 920167782, %v717
    %v733 = vshrl.u32 1326507024, %v718
    %v734 = vor.u32 %v732, %v733
    %vm735 = vcmp.lt.s32.totalorder %v716, 1
    %vm736 = vcmp.lt.s32.totalorder %v716, 2
    %vm737 = vcmp.lt.s32.totalorder %v716, 3
    %vm738 = vcmp.lt.s32.totalorder %v716, 4
    %v739 = vsel %vm735, %v719, %v722
    %v740 = vsel %vm738, %v728, 2102212464
    %v741 = vsel %vm737, %v725, %v740
    %v742 = vsel %vm736, %v739, %v741
    %v743 = vsel %vm735, %v722, %v725
    %v744 = vsel %vm738, %v731, 920167782
    %v745 = vsel %vm737, %v728, %v744
    %v746 = vsel %vm736, %v743, %v745
    %v747 = vsel %vm735, %v725, %v728
    %v748 = vsel %vm738, %v734, 1326507024
    %v749 = vsel %vm737, %v731, %v748
    %v750 = vsel %vm736, %v747, %v749
    %v751 = vshll.u32 %v711, 8
    %v752 = vmul.u32.u64.compose %v751, %v750
    %v753 = vextract.low.u32 %v752
    %v754 = vextract.high.u32 %v752
    %v755 = vmul.u32.u64.compose %v751, %v746
    %v756 = vextract.low.u32 %v755
    %v757 = vextract.high.u32 %v755
    %v758 = vmul.u32 %v751, %v742
    %v759 = vadd.s32 %v754, %v756
    %vm760 = vc.u32 %v754, %v756
    %v761 = vadd.s32 %v757, 1
    %v762 = vsel %vm760, %v761, %v757
    %v763 = vadd.s32 %v758, %v762
    %v764 = vadd.s32 %v763, 536870912
    %v765 = vshrl.u32 %v764, 30
    %v766 = vshll.u32 %v765, 30
    %v767 = vsub.s32 %v763, %v766
    %vm768 = vcmp.lt.s32.totalorder %v767, 0
    %v769 = vsub.s32 0, %v767
    %v770 = vsel %vm768, %v769, %v767
    %v771 = vclz %v770
    %v772 = vsub.s32 %v771, 2
    %vm773 = vcmp.gt.s32.totalorder 0, %v772
    %v774 = vsel %vm773, 0, %v772
    %v775 = vsub.s32 32, %v774
    %v776 = vshll.u32 %v767, %v774
    %v777 = vshrl.u32 %v759, %v775
    %v778 = vor.u32 %v776, %v777
    %v779 = vsub.s32 4294967266, %v774
    %v780 = vadd.s32 %v779, 127
    %v781 = vshll.u32 %v780, 23
    %v782 = vor.u32 4788187, %v781
    %v783 = vand.u32 2147483647, %v782
    %v785 = vcvt.s32.f32 %v778
    %v786 = vmul.f32 %v785, %v783
    %v787 = vxor.u32 %v786, 2147483648
    %v788 = vsel %vm705, %v787, %v786
    %v789 = vsub.s32 4, %v765
    %v790 = vsel %vm705, %v789, %v765
    %v791 = vsel %vm704, %v700, %v788
    %v792 = vsel %vm704, 0, %v790
    %v793 = vcosq.f32.pop %v791
    %v794 = vsinq.f32.pop %v791
    %vm795 = vweird.f32 %v700
    %v796 = vadd.s32 %v792, 3
    %v797 = vand.u32 %v796, 3
    %vm798 = vcmp.lt.s32.totalorder %v797, 2
    %vm799 = vcmp.eq.s32.totalorder %v797, 0
    %v800 = vxor.u32 %v794, 2147483648
    %v801 = vsel %vm799, %v793, %v800
    %vm802 = vcmp.eq.s32.totalorder %v797, 2
    %v803 = vxor.u32 %v793, 2147483648
    %v804 = vsel %vm802, %v803, %v794
    %v805 = vsel %vm798, %v801, %v804
    %v806 = vsel %vm795, nan, %v805
    %v807 = vld [vmem:[%s3] sm:$0xf]
    %v808 = vld [vmem:[%s3 + $0x4] sm:$0xf]
    %v809 = vld [vmem:[%s3 + $0x8] sm:$0xf]
    %v810 = vld [vmem:[%s3 + $0xc] sm:$0xf]
    %v811 = vunpack.c.l.bf16 %v807
    %v812 = vunpack.c.l.bf16 %v808
    %v813 = vunpack.c.l.bf16 %v809
    %v814 = vunpack.c.l.bf16 %v810
    %v815 = vld [vmem:[%s5] sm:$0x1]
    %v817 = vlaneseq
    %v818 = vshrl.u32 %v817, 7
    %v819 = vsub.s32 0, %v818
    %v820 = vrot.slane %v815, %v819
    %v823 = vsel %vm435, %v806, 0
    %825 = vmatprep.subr.mxu0 0.0
    %826 = vmatpush1.msra.mxu0 %v811
    %827 = vmatprep.subr.mxu0 0.0
    %828 = vmatpush1.msra.mxu0 %v812
    %829 = vmatprep.subr.mxu0 0.0
    %830 = vmatpush1.msra.mxu0 %v813
    %831 = vmatprep.subr.mxu0 0.0
    %832 = vmatpush1.msra.mxu0 %v814
    %833 = vmatprep.subr.mxu0 0.0
    %834 = vmatpush1.msra.mxu0 0.0
    %835 = vmatprep.subr.mxu0 0.0
    %836 = vmatpush1.msra.mxu0 0.0
    %837 = vmatprep.subr.mxu0 0.0
    %838 = vmatpush1.msra.mxu0 0.0
    %839 = vmatprep.subr.mxu0 0.0
    %840 = vmatpush1.msra.mxu0 0.0
    %841 = vmatprep.subr.mxu0 0.0
    %842 = vmatpush1.msra.mxu0 0.0
    %843 = vmatprep.subr.mxu0 0.0
    %844 = vmatpush1.msra.mxu0 0.0
    %845 = vmatprep.subr.mxu0 0.0
    %846 = vmatpush1.msra.mxu0 0.0
    %847 = vmatprep.subr.mxu0 0.0
    %848 = vmatpush1.msra.mxu0 0.0
    %849 = vmatprep.subr.mxu0 0.0
    %850 = vmatpush1.msra.mxu0 0.0
    %851 = vmatprep.subr.mxu0 0.0
    %852 = vmatpush1.msra.mxu0 0.0
    %853 = vmatprep.subr.mxu0 0.0
    %854 = vmatpush1.msra.mxu0 0.0
    %855 = vmatprep.subr.mxu0 0.0
    %856 = vmatpush1.msra.mxu0 0.0
    %857 = vmatprep.subr.mxu0 0.0
    %858 = vmatpush1.msra.mxu0 0.0
    %859 = vmatprep.subr.mxu0 0.0
    %860 = vmatpush1.msra.mxu0 0.0
    %861 = vmatprep.subr.mxu0 0.0
    %862 = vmatpush1.msra.mxu0 0.0
    %863 = vmatprep.subr.mxu0 0.0
    %864 = vmatpush1.msra.mxu0 0.0
    %865 = vmatprep.subr.mxu0 0.0
    %866 = vmatpush1.msra.mxu0 0.0
    %867 = vmatprep.subr.mxu0 0.0
    %868 = vmatpush1.msra.mxu0 0.0
    %869 = vmatprep.subr.mxu0 0.0
    %870 = vmatpush1.msra.mxu0 0.0
    %871 = vmatprep.subr.mxu0 0.0
    %872 = vmatpush1.msra.mxu0 0.0
    %873 = vmatprep.subr.mxu0 0.0
    %874 = vmatpush1.msra.mxu0 0.0
    %875 = vmatprep.subr.mxu0 0.0
    %876 = vmatpush1.msra.mxu0 0.0
    %877 = vmatprep.subr.mxu0 0.0
    %878 = vmatpush1.msra.mxu0 0.0
    %879 = vmatprep.subr.mxu0 0.0
    %880 = vmatpush1.msra.mxu0 0.0
    %881 = vmatprep.subr.mxu0 0.0
    %882 = vmatpush1.msra.mxu0 0.0
    %883 = vmatprep.subr.mxu0 0.0
    %884 = vmatpush1.msra.mxu0 0.0
    %885 = vmatprep.subr.mxu0 0.0
    %886 = vmatpush1.msra.mxu0 0.0
    %887 = vmatprep.subr.mxu0 0.0
    %888 = vmatpush1.msra.mxu0 0.0
    %889 = vmatprep.mubr.f32.mxu0 0.0
    %890 = vmatmul.mubr.f32.gmra.mrb[0].mxu0 %v823
    %v891 = vpop.f32.mrb[0].mxu0
    %v892 = vadd.f32 %v820, %v891
    %v893 = vpop.f32.mrb[0].mxu0
    %894 = vdwg.mxu0
    %895 = vst [vmem:[#allocation2] sm:$0xff] %v892
    // Predicated region
    $region26: #{nextchar_forward.1} parent=1 // pred_check
      _
    $region27: #{nextchar_forward.1} parent=1 // pred_check_branch
      %897 = sbr.rel (0) target = $region29
    $region28: #{nextchar_forward.1} parent=1 // pred_region
      %s899 = ssub.s32 128, 128
      %900 = vsyncadd [#allocation3], %s899
      %s902 = sshll.u32 [#allocation2], 4
      %s903 = int_to_ptr.vmem [resolvable:$true] %s902
      %905 = dma.vmem_to_hbm [thread:$0]  %s903, 128, %s6, [#allocation3]
    $region29: #{nextchar_forward.1} parent=1 // pred_fallthru
      _
    // Predicated region
    $region30: #{nextchar_forward.1} parent=1 // pred_check
      _
    $region31: #{nextchar_forward.1} parent=1 // pred_check_branch
      %907 = sbr.rel (0) target = $region33
    $region32: #{nextchar_forward.1} parent=1 // pred_region
      %908 = dma.done [#allocation3], 128
    $region33: #{nextchar_forward.1} parent=1 // pred_fallthru
      _
    %909 = vsyncpa [#allocation3], 1

</llo_original>
